<compile_context>
chip_gen: v6e
topology: v6e:2x2x1
jax: 0.10.0
libtpu: 0.0.40
codegen_flags: <defaults>
</compile_context>

<pallas_src>
import functools

import jax
import jax.numpy as jnp
from jax.experimental import pallas as pl
from jax.experimental.pallas import tpu as pltpu


def _round_up(x, m):
    return -(-x // m) * m


def _vmem_capacity_bytes():
    """Physical per-core VMEM, with a conservative fallback (v7x = 64 MiB)."""
    try:
        info = pltpu.get_tpu_info()
        cap = getattr(info, "vmem_capacity_bytes", None)
        if cap:
            return int(cap)
    except Exception:
        pass
    return 64 << 20


def _pick_tile_r(r):
    """Rows (of 128 batch elements) per grid step, sized from the VMEM budget.

    Per TILE_R row the resident working set is
        2 inputs x 2 pipeline buffers x (3, TILE_R, 128) f32    (inputs)
      + 2 x (TILE_R, 128) f32                                   (accumulators)
      = 7 KiB, so we spend ~1/4 of physical VMEM on it.  This gives
    TILE_R ~ 2300 on v7x (64 MiB) and ~4600 on v5e/v6e (128 MiB): multi-MiB
    DMA per step, far above the ~0.35 us fixed grid-step overhead.
    """
    bytes_per_r = (2 * 2 * 3 + 2) * 128 * 4
    tile_r = (_vmem_capacity_bytes() // 4) // bytes_per_r
    tile_r = max(8, min(int(tile_r), 8192))
    tile_r = (tile_r // 8) * 8
    return min(tile_r, _round_up(r, 8))


def _pose_loss_kernel(pred_ref, true_ref, out_ref, acc_loc, acc_ori,
                      *, alpha, beta, inv_b):
    i = pl.program_id(0)

    @pl.when(i == 0)
    def _():
        acc_loc[...] = jnp.zeros_like(acc_loc)
        acc_ori[...] = jnp.zeros_like(acc_ori)

    # (3, TILE_R, 128) block: plane 0 = x, plane 1 = y, plane 2 = theta.
    p = pred_ref[...].astype(jnp.float32)
    t = true_ref[...].astype(jnp.float32)
    d = p - t
    dx, dy, dth = d[0], d[1], d[2]          # free leading-axis split

    # Lane/sublane-shaped partial sums: no per-step XLU reduction, the
    # cross-lane reduce is deferred to the finalize (also better f32 accum).
    acc_loc[...] += dx * dx + dy * dy
    s = jnp.sin(dth * 0.5)
    acc_ori[...] += 2.0 * (s * s)           # == 1 - cos(dth), stable near 0

    @pl.when(i == pl.num_programs(0) - 1)
    def _():
        pose = jnp.sum(acc_loc[...]) * inv_b     # MSE('sum') / B
        ori = jnp.sum(acc_ori[...]) * inv_b      # mean over B
        out_ref[0] = alpha * pose + beta * ori
        out_ref[1] = pose
        out_ref[2] = ori


def _pose_loss_xla(pred_pose, true_pose, alpha, beta):
    """Small-B fast path: XLA fuses this; a pallas_call would be pure overhead."""
    B = true_pose.shape[0]
    p = jnp.reshape(pred_pose, (B, 3)).astype(jnp.float32)
    t = jnp.reshape(true_pose, (B, 3)).astype(jnp.float32)
    d = p - t
    pose = jnp.sum(d[:, :2] * d[:, :2]) / B
    ori = jnp.mean(2.0 * jnp.sin(d[:, 2] * 0.5) ** 2)
    return alpha * pose + beta * ori, pose, ori


def pose_loss(pred_pose, true_pose, alpha=1.0, beta=1.0, *,
              tile_r=None, min_pallas_batch=4096):
    """JAX/Pallas equivalent of PoseLoss.forward.

    pred_pose: any array with B*3 elements (e.g. (B, 3))
    true_pose: (B, C, H, W) with C*H*W == 3 (e.g. (B, 3, 1, 1))
    Returns (total_loss, pose_loss, orientation_loss) as f32 scalars.
    """
    B = true_pose.shape[0]
    alpha = float(alpha)
    beta = float(beta)

    if B < min_pallas_batch:
        return _pose_loss_xla(pred_pose, true_pose, alpha, beta)

    # (B, 3) -> (3, R_pad, 128): components on the leading axis, batch on
    # (sublane-rows x 128 lanes) so every vreg is fully dense.
    # TODO(synk): emit the (3, R, 128) layout from the producer so this
    # transpose + pad pass (an extra HBM read+write of both tensors) disappears.
    pred = jnp.reshape(pred_pose, (B, 3)).T
    true = jnp.reshape(true_pose, (B, 3)).T

    r = -(-B // 128)
    if tile_r is None:
        tile_r = _pick_tile_r(r)
    tile_r = max(8, (int(tile_r) // 8) * 8)
    tile_r = min(tile_r, _round_up(r, 8))
    r_pad = _round_up(r, tile_r)
    b_pad = r_pad * 128

    if b_pad != B:
        # Identical zero padding on pred/true => diff == 0 in the pad region,
        # contributing 0 to both the squared-error and 2*sin^2 terms.
        pred = jnp.pad(pred, ((0, 0), (0, b_pad - B)))
        true = jnp.pad(true, ((0, 0), (0, b_pad - B)))
    pred = pred.reshape(3, r_pad, 128)
    true = true.reshape(3, r_pad, 128)

    nsteps = r_pad // tile_r

    # Double-buffered input windows + accumulators, with headroom; overrides
    # the small default scoped-VMEM limits (v5e 16 MiB / v6e-v7x 32 MiB).
    block_elems = 3 * tile_r * 128
    vmem_needed = (2 * block_elems * (pred.dtype.itemsize + true.dtype.itemsize)
                   + 2 * tile_r * 128 * 4)
    vmem_limit = int(min(vmem_needed + (4 << 20), 100 << 20))

    kernel = functools.partial(
        _pose_loss_kernel, alpha=alpha, beta=beta, inv_b=1.0 / float(B))

    # TODO(synk): on v7x (2 TensorCores) add a leading size-2 "parallel" grid
    # axis with per-core partial outputs combined in the wrapper for ~2x.
    out = pl.pallas_call(
        kernel,
        out_shape=jax.ShapeDtypeStruct((3,), jnp.float32),
        grid_spec=pltpu.PrefetchScalarGridSpec(
            num_scalar_prefetch=0,
            grid=(nsteps,),
            in_specs=[
                pl.BlockSpec((3, tile_r, 128), lambda i: (0, i, 0)),
                pl.BlockSpec((3, tile_r, 128), lambda i: (0, i, 0)),
            ],
            out_specs=pl.BlockSpec(memory_space=pltpu.SMEM),
            scratch_shapes=[
                pltpu.VMEM((tile_r, 128), jnp.float32),   # sum (x,y) squared err
                pltpu.VMEM((tile_r, 128), jnp.float32),   # sum 2*sin^2(theta/2)
            ],
        ),
        compiler_params=pltpu.CompilerParams(
            dimension_semantics=("arbitrary",),
            vmem_limit_bytes=vmem_limit,
        ),
    )(pred, true)

    return out[0], out[1], out[2]


def _reference(pred_pose, true_pose, alpha=1.0, beta=1.0):
    """Direct transcription of the PyTorch module (1 - cos form)."""
    B = true_pose.shape[0]
    p = jnp.reshape(pred_pose, (B, 3)).astype(jnp.float32)
    t = jnp.reshape(true_pose, (B, 3)).astype(jnp.float32)
    ploss = jnp.sum((p[:, :2] - t[:, :2]) ** 2) / B
    oloss = jnp.mean(1.0 - jnp.cos(p[:, 2] - t[:, 2]))
    return alpha * ploss + beta * oloss, ploss, oloss


def _check(got, want, atol=1e-5, rtol=1e-4):
    for g, w in zip(got, want):
        assert jnp.allclose(g, w, atol=atol, rtol=rtol), (g, w)


if __name__ == "__main__":
    key = jax.random.PRNGKey(0)
    k1, k2, k3, k4 = jax.random.split(key, 4)

    # Case 1: the module's nominal small shapes (pred (B,3), true NCHW
    # (B,3,1,1)), forced through the Pallas kernel (single grid step).
    B = 8
    pred_pose = jax.random.normal(k1, (B, 3), dtype=jnp.float32)
    true_pose = jax.random.normal(k2, (B, 3, 1, 1), dtype=jnp.float32)
    out = pose_loss(pred_pose, true_pose, alpha=1.0, beta=1.0,
                    min_pallas_batch=0)
    jax.block_until_ready(out)
    _check(out, _reference(pred_pose, true_pose))

    # Case 1b: the default small-B XLA fast path gives the same numbers.
    out_fast = pose_loss(pred_pose, true_pose, alpha=1.0, beta=1.0)
    jax.block_until_ready(out_fast)
    _check(out_fast, _reference(pred_pose, true_pose))

    # Case 2: multi-step grid + accumulator carry + ragged batch padding
    # (tiny tile_r forces several grid steps at a small test size).
    B2 = 2000
    pred2 = jax.random.normal(k3, (B2, 3), dtype=jnp.float32)
    true2 = jax.random.normal(k4, (B2, 3, 1, 1), dtype=jnp.float32)
    out2 = pose_loss(pred2, true2, alpha=0.5, beta=2.0,
                     tile_r=8, min_pallas_batch=0)
    jax.block_until_ready(out2)
    _check(out2, _reference(pred2, true2, alpha=0.5, beta=2.0))

    print("KERNEL_OK")
</pallas_src>

<mosaic_0001>
module attributes {stable_mosaic.version = 11 : i64} {
  func.func @_pose_loss_kernel(%arg0: i32, %arg1: memref<3x8x128xf32, #tpu.memory_space<vmem>>, %arg2: memref<3x8x128xf32, #tpu.memory_space<vmem>>, %arg3: memref<3xf32, #tpu.memory_space<smem>>, %arg4: memref<8x128xf32, #tpu.memory_space<vmem>>, %arg5: memref<8x128xf32, #tpu.memory_space<vmem>>) attributes {dimension_semantics = [#tpu.dimension_semantics<arbitrary>], iteration_bounds = array<i64: 1>, scalar_prefetch = 0 : i64, scratch_operands = 2 : i64, tpu.core_type = #tpu.core_type<tc>, window_params = [{transform_indices = @transform_0, window_bounds = array<i64: 3, 8, 128>}, {transform_indices = @transform_1, window_bounds = array<i64: 3, 8, 128>}, {transform_indices = @transform_2, window_bounds = array<i64: 3>}]} {
    %c0_i32 = arith.constant 0 : i32
    %0 = arith.cmpi eq, %arg0, %c0_i32 : i32
    %1 = arith.extui %0 : i1 to i32
    %c0_i32_0 = arith.constant 0 : i32
    %2 = arith.cmpi ne, %1, %c0_i32_0 : i32
    scf.if %2 {
      %cst_17 = arith.constant 0.000000e+00 : f32
      %30 = vector.broadcast %cst_17 : f32 to vector<8x128xf32>
      %c0_18 = arith.constant 0 : index
      %c0_19 = arith.constant 0 : index
      %31 = vector.load %arg4[%c0_18, %c0_19] : memref<8x128xf32, #tpu.memory_space<vmem>>, vector<8x128xf32>
      tpu.vector_store %arg4[%c0_18, %c0_19], %30 {strides = array<i32>} : memref<8x128xf32, #tpu.memory_space<vmem>>, vector<8x128xf32>,
      %cst_20 = arith.constant 0.000000e+00 : f32
      %32 = vector.broadcast %cst_20 : f32 to vector<8x128xf32>
      %c0_21 = arith.constant 0 : index
      %c0_22 = arith.constant 0 : index
      %33 = vector.load %arg5[%c0_21, %c0_22] : memref<8x128xf32, #tpu.memory_space<vmem>>, vector<8x128xf32>
      tpu.vector_store %arg5[%c0_21, %c0_22], %32 {strides = array<i32>} : memref<8x128xf32, #tpu.memory_space<vmem>>, vector<8x128xf32>,
    } else {
    }
    %c0 = arith.constant 0 : index
    %c0_1 = arith.constant 0 : index
    %c0_2 = arith.constant 0 : index
    %3 = vector.load %arg1[%c0, %c0_1, %c0_2] : memref<3x8x128xf32, #tpu.memory_space<vmem>>, vector<3x8x128xf32>
    %c0_3 = arith.constant 0 : index
    %c0_4 = arith.constant 0 : index
    %c0_5 = arith.constant 0 : index
    %4 = vector.load %arg2[%c0_3, %c0_4, %c0_5] : memref<3x8x128xf32, #tpu.memory_space<vmem>>, vector<3x8x128xf32>
    %5 = arith.subf %3, %4 : vector<3x8x128xf32>
    %6 = vector.extract_strided_slice %5 {offsets = [0, 0, 0], sizes = [1, 8, 128], strides = [1, 1, 1]} : vector<3x8x128xf32> to vector<1x8x128xf32>
    %7 = vector.shape_cast %6 : vector<1x8x128xf32> to vector<8x128xf32>
    %8 = vector.extract_strided_slice %5 {offsets = [1, 0, 0], sizes = [1, 8, 128], strides = [1, 1, 1]} : vector<3x8x128xf32> to vector<1x8x128xf32>
    %9 = vector.shape_cast %8 : vector<1x8x128xf32> to vector<8x128xf32>
    %10 = vector.extract_strided_slice %5 {offsets = [2, 0, 0], sizes = [1, 8, 128], strides = [1, 1, 1]} : vector<3x8x128xf32> to vector<1x8x128xf32>
    %11 = vector.shape_cast %10 : vector<1x8x128xf32> to vector<8x128xf32>
    %c0_6 = arith.constant 0 : index
    %c0_7 = arith.constant 0 : index
    %12 = vector.load %arg4[%c0_6, %c0_7] : memref<8x128xf32, #tpu.memory_space<vmem>>, vector<8x128xf32>
    %13 = arith.mulf %7, %7 : vector<8x128xf32>
    %14 = arith.mulf %9, %9 : vector<8x128xf32>
    %15 = arith.addf %13, %14 : vector<8x128xf32>
    %16 = arith.addf %12, %15 : vector<8x128xf32>
    %c0_8 = arith.constant 0 : index
    %c0_9 = arith.constant 0 : index
    %17 = vector.load %arg4[%c0_8, %c0_9] : memref<8x128xf32, #tpu.memory_space<vmem>>, vector<8x128xf32>
    tpu.vector_store %arg4[%c0_8, %c0_9], %16 {strides = array<i32>} : memref<8x128xf32, #tpu.memory_space<vmem>>, vector<8x128xf32>,
    %cst = arith.constant 5.000000e-01 : f32
    %18 = vector.broadcast %cst : f32 to vector<8x128xf32>
    %19 = arith.mulf %11, %18 : vector<8x128xf32>
    %20 = math.sin %19 : vector<8x128xf32>
    %c0_10 = arith.constant 0 : index
    %c0_11 = arith.constant 0 : index
    %21 = vector.load %arg5[%c0_10, %c0_11] : memref<8x128xf32, #tpu.memory_space<vmem>>, vector<8x128xf32>
    %22 = arith.mulf %20, %20 : vector<8x128xf32>
    %cst_12 = arith.constant 2.000000e+00 : f32
    %23 = vector.broadcast %cst_12 : f32 to vector<8x128xf32>
    %24 = arith.mulf %23, %22 : vector<8x128xf32>
    %25 = arith.addf %21, %24 : vector<8x128xf32>
    %c0_13 = arith.constant 0 : index
    %c0_14 = arith.constant 0 : index
    %26 = vector.load %arg5[%c0_13, %c0_14] : memref<8x128xf32, #tpu.memory_space<vmem>>, vector<8x128xf32>
    tpu.vector_store %arg5[%c0_13, %c0_14], %25 {strides = array<i32>} : memref<8x128xf32, #tpu.memory_space<vmem>>, vector<8x128xf32>,
    %c0_i32_15 = arith.constant 0 : i32
    %27 = arith.cmpi eq, %arg0, %c0_i32_15 : i32
    %28 = arith.extui %27 : i1 to i32
    %c0_i32_16 = arith.constant 0 : i32
    %29 = arith.cmpi ne, %28, %c0_i32_16 : i32
    scf.if %29 {
      %c0_17 = arith.constant 0 : index
      %c0_18 = arith.constant 0 : index
      %30 = vector.load %arg4[%c0_17, %c0_18] : memref<8x128xf32, #tpu.memory_space<vmem>>, vector<8x128xf32>
      %31 = vector.shape_cast %30 : vector<8x128xf32> to vector<1x8x128xf32>
      %cst_19 = arith.constant dense<0.000000e+00> : vector<1xf32>
      %32 = vector.multi_reduction <add>, %31, %cst_19 [1, 2] : vector<1x8x128xf32> to vector<1xf32>
      %33 = vector.shape_cast %32 : vector<1xf32> to vector<1x1x1xf32>
      %34 = vector.extract %33[0, 0, 0] : f32 from vector<1x1x1xf32>
      %cst_20 = arith.constant 1.250000e-01 : f32
      %35 = arith.mulf %34, %cst_20 : f32
      %c0_21 = arith.constant 0 : index
      %c0_22 = arith.constant 0 : index
      %36 = vector.load %arg5[%c0_21, %c0_22] : memref<8x128xf32, #tpu.memory_space<vmem>>, vector<8x128xf32>
      %37 = vector.shape_cast %36 : vector<8x128xf32> to vector<1x8x128xf32>
      %cst_23 = arith.constant dense<0.000000e+00> : vector<1xf32>
      %38 = vector.multi_reduction <add>, %37, %cst_23 [1, 2] : vector<1x8x128xf32> to vector<1xf32>
      %39 = vector.shape_cast %38 : vector<1xf32> to vector<1x1x1xf32>
      %40 = vector.extract %39[0, 0, 0] : f32 from vector<1x1x1xf32>
      %cst_24 = arith.constant 1.250000e-01 : f32
      %41 = arith.mulf %40, %cst_24 : f32
      %cst_25 = arith.constant 1.000000e+00 : f32
      %42 = arith.mulf %cst_25, %35 : f32
      %cst_26 = arith.constant 1.000000e+00 : f32
      %43 = arith.mulf %cst_26, %41 : f32
      %44 = arith.addf %42, %43 : f32
      %c0_27 = arith.constant 0 : index
      %45 = memref.load %arg3[%c0_27] : memref<3xf32, #tpu.memory_space<smem>>
      memref.store %44, %arg3[%c0_27] : memref<3xf32, #tpu.memory_space<smem>>
      %c1 = arith.constant 1 : index
      %46 = memref.load %arg3[%c1] : memref<3xf32, #tpu.memory_space<smem>>
      memref.store %35, %arg3[%c1] : memref<3xf32, #tpu.memory_space<smem>>
      %c2 = arith.constant 2 : index
      %47 = memref.load %arg3[%c2] : memref<3xf32, #tpu.memory_space<smem>>
      memref.store %41, %arg3[%c2] : memref<3xf32, #tpu.memory_space<smem>>
    } else {
    }
    return
  }
  func.func @transform_0(%arg0: i32) -> (i32, i32, i32) {
    %c0_i32 = arith.constant 0 : i32
    %c0_i32_0 = arith.constant 0 : i32
    %c0_i32_1 = arith.constant 0 : i32
    return %c0_i32, %arg0, %c0_i32_0 : i32, i32, i32
  }
  func.func @transform_1(%arg0: i32) -> (i32, i32, i32) {
    %c0_i32 = arith.constant 0 : i32
    %c0_i32_0 = arith.constant 0 : i32
    %c0_i32_1 = arith.constant 0 : i32
    return %c0_i32, %arg0, %c0_i32_0 : i32, i32, i32
  }
  func.func @transform_2(%arg0: i32) -> i32 {
    %c0_i32 = arith.constant 0 : i32
    %c0_i32_0 = arith.constant 0 : i32
    return %c0_i32 : i32
  }
}

</mosaic_0001>

<llo_original>
// kernel: tpu_custom_call.1
$region0: #{tpu_custom_call.1}
  #allocation0 [shape = 'u32[]', space=smem, size = 0x4, offset = 0x4, fixed_abs, tag = 'smem constant byte address 0x4 - core index']
  #allocation1 [shape = 'u32[144,128]{1,0:T(1,128)}', space=vmem, size = 0x12000, scoped, tag = 'internal scratch']
  #allocation2 [shape = 'f32[8,128]{1,0:T(8,128)}', space=vmem, size = 0x1000, scoped, tag = 'scratch operand']
  #allocation3 [shape = 'f32[8,128]{1,0:T(8,128)}', space=vmem, size = 0x1000, scoped, tag = 'scratch operand']
  %s0 = inlined_call_operand.hbm [shape: f32[3,8,128], index: 0, kind: input, shape index: {}]
  %s1 = inlined_call_operand.hbm [shape: f32[3,8,128], index: 1, kind: input, shape index: {}]
  %s2 = inlined_call_operand.hbm [shape: f32[3], index: 2, kind: output, shape index: {}]
  %s3 = sld [smem:[#allocation0]]
  $region34: #{tpu_custom_call.1} parent=0
    _
  %s5 = ssub.s32 1, %s3
  %s6 = scalar_select 0, %s5, %s3
  $region1: #{tpu_custom_call.1} parent=0
    #allocation4 [shape = 'u8[12288]{0}', space=vmem, size = 0x3000, scoped, tag = 'input window, operand 0, single buffered']
    #allocation5 [shape = 's32[1]{0}', space=sflag, size = 0x4, scoped, tag = 'scoped memory for tpu_custom_call.1']
    #allocation6 [shape = 's32[1]{0}', space=sflag, size = 0x4, scoped, tag = 'scoped memory for tpu_custom_call.1']
    #allocation7 [shape = 'u8[12288]{0}', space=vmem, size = 0x3000, scoped, tag = 'input window, operand 1, single buffered']
    #allocation8 [shape = 's32[1]{0}', space=sflag, size = 0x4, scoped, tag = 'scoped memory for tpu_custom_call.1']
    #allocation9 [shape = 'u8[512]{0}', space=smem, size = 0x200, scoped, tag = 'output window, operand 0, single buffered']
    %7 = vsyncpa [#allocation5], 0
    %8 = vsyncpa [#allocation8], 0
    %9 = vsyncpa [#allocation6], 0
    // Predicated region
    $region2: #{tpu_custom_call.1} parent=1 // pred_check
      _
    $region3: #{tpu_custom_call.1} parent=1 // pred_check_branch
      %11 = sbr.rel (0) target = $region5
    $region4: #{tpu_custom_call.1} parent=1 // pred_region
      %s13 = ssub.s32 384, 384
      %14 = vsyncadd [#allocation5], %s13
      %s15 = sshll.u32 [#allocation4], 4
      %s16 = int_to_ptr.vmem [resolvable:$true] %s15
      %21 = dma.hbm_to_vmem [thread:$0]  %s0, 384, %s16, [#allocation5], 128, 128, 8
    $region5: #{tpu_custom_call.1} parent=1 // pred_fallthru
      _
    // Predicated region
    $region6: #{tpu_custom_call.1} parent=1 // pred_check
      _
    $region7: #{tpu_custom_call.1} parent=1 // pred_check_branch
      %23 = sbr.rel (0) target = $region9
    $region8: #{tpu_custom_call.1} parent=1 // pred_region
      %s25 = ssub.s32 384, 384
      %26 = vsyncadd [#allocation8], %s25
      %s27 = sshll.u32 [#allocation7], 4
      %s28 = int_to_ptr.vmem [resolvable:$true] %s27
      %33 = dma.hbm_to_vmem [thread:$0]  %s1, 384, %s28, [#allocation8], 128, 128, 8
    $region9: #{tpu_custom_call.1} parent=1 // pred_fallthru
      _
    // Predicated region
    $region10: #{tpu_custom_call.1} parent=1 // pred_check
      _
    $region11: #{tpu_custom_call.1} parent=1 // pred_check_branch
      %35 = sbr.rel (0) target = $region13
    $region12: #{tpu_custom_call.1} parent=1 // pred_region
      %36 = dma.done [#allocation5], 384
    $region13: #{tpu_custom_call.1} parent=1 // pred_fallthru
      _
    // Predicated region
    $region14: #{tpu_custom_call.1} parent=1 // pred_check
      _
    $region15: #{tpu_custom_call.1} parent=1 // pred_check_branch
      %38 = sbr.rel (0) target = $region17
    $region16: #{tpu_custom_call.1} parent=1 // pred_region
      %39 = dma.done [#allocation8], 384
    $region17: #{tpu_custom_call.1} parent=1 // pred_fallthru
      _
    %p40 = scmp.eq.s32.totalorder 0, 0
    // Predicated region
    $region18: #{tpu_custom_call.1} parent=1 // pred_check
      %p41 = pneg %p40
    $region19: #{tpu_custom_call.1} parent=1 // pred_check_branch
      %43 = sbr.rel (%p41) target = $region21
    $region20: #{tpu_custom_call.1} parent=1 // pred_region
      %44 = vst [vmem:[#allocation2] sm:$0xff] 0.0
      %45 = vst [vmem:[#allocation3] sm:$0xff] 0.0
    $region21: #{tpu_custom_call.1} parent=1 // pred_fallthru
      _
    %v46 = vld [vmem:[#allocation4] sm:$0xff]
    %v47 = vld [vmem:[#allocation4 + $0x8] sm:$0xff]
    %v48 = vld [vmem:[#allocation4 + $0x10] sm:$0xff]
    %v49 = vld [vmem:[#allocation7] sm:$0xff]
    %v50 = vld [vmem:[#allocation7 + $0x8] sm:$0xff]
    %v51 = vld [vmem:[#allocation7 + $0x10] sm:$0xff]
    %v52 = vsub.f32 %v46, %v49
    %v53 = vsub.f32 %v47, %v50
    %v54 = vsub.f32 %v48, %v51
    %v55 = vld [vmem:[#allocation2] sm:$0xff]
    %v56 = vmul.f32 %v52, %v52
    %v57 = vmul.f32 %v53, %v53
    %v58 = vadd.f32 %v56, %v57
    %v59 = vadd.f32 %v55, %v58
    %60 = vst [vmem:[#allocation2] sm:$0xff] %v59
    %v61 = vmul.f32 %v54, 0.5
    %v62 = vand.u32 2147483647, %v61
    %vm63 = vcmp.le.f32.partialorder %v62, 0.7853982
    %vm64 = vcmp.lt.s32.totalorder %v61, 0
    %v65 = vand.u32 %v61, 2139095040
    %v66 = vshrl.u32 %v65, 23
    %v67 = vsub.s32 %v66, 127
    %v68 = vand.u32 2147483647, %v61
    %v69 = vand.u32 %v68, 8388607
    %v70 = vor.u32 %v69, 8388608
    %v71 = vsub.s32 0, %v70
    %v72 = vadd.s32 %v67, 1
    %vm73 = vcmp.gt.s32.totalorder %v72, 0
    %v74 = vsel %vm73, %v72, 0
    %v75 = vshrl.u32 %v74, 5
    %v76 = vand.u32 %v74, 31
    %v77 = vsub.s32 32, %v76
    %v78 = vshrl.u32 683565275, %v77
    %v79 = vshll.u32 683565275, %v76
    %v80 = vshrl.u32 2475754826, %v77
    %v81 = vor.u32 %v79, %v80
    %v82 = vshll.u32 2475754826, %v76
    %v83 = vshrl.u32 2131351028, %v77
    %v84 = vor.u32 %v82, %v83
    %v85 = vshll.u32 2131351028, %v76
    %v86 = vshrl.u32 2102212464, %v77
    %v87 = vor.u32 %v85, %v86
    %v88 = vshll.u32 2102212464, %v76
    %v89 = vshrl.u32 920167782, %v77
    %v90 = vor.u32 %v88, %v89
    %v91 = vshll.u32 920167782, %v76
    %v92 = vshrl.u32 1326507024, %v77
    %v93 = vor.u32 %v91, %v92
    %vm94 = vcmp.lt.s32.totalorder %v75, 1
    %vm95 = vcmp.lt.s32.totalorder %v75, 2
    %vm96 = vcmp.lt.s32.totalorder %v75, 3
    %vm97 = vcmp.lt.s32.totalorder %v75, 4
    %v98 = vsel %vm94, %v78, %v81
    %v99 = vsel %vm97, %v87, 2102212464
    %v100 = vsel %vm96, %v84, %v99
    %v101 = vsel %vm95, %v98, %v100
    %v102 = vsel %vm94, %v81, %v84
    %v103 = vsel %vm97, %v90, 920167782
    %v104 = vsel %vm96, %v87, %v103
    %v105 = vsel %vm95, %v102, %v104
    %v106 = vsel %vm94, %v84, %v87
    %v107 = vsel %vm97, %v93, 1326507024
    %v108 = vsel %vm96, %v90, %v107
    %v109 = vsel %vm95, %v106, %v108
    %v110 = vshll.u32 %v70, 8
    %v111 = vmul.u32.u64.compose %v110, %v109
    %v112 = vextract.low.u32 %v111
    %v113 = vextract.high.u32 %v111
    %v114 = vmul.u32.u64.compose %v110, %v105
    %v115 = vextract.low.u32 %v114
    %v116 = vextract.high.u32 %v114
    %v117 = vmul.u32 %v110, %v101
    %v118 = vadd.s32 %v113, %v115
    %vm119 = vc.u32 %v113, %v115
    %v120 = vadd.s32 %v116, 1
    %v121 = vsel %vm119, %v120, %v116
    %v122 = vadd.s32 %v117, %v121
    %v123 = vadd.s32 %v122, 536870912
    %v124 = vshrl.u32 %v123, 30
    %v125 = vshll.u32 %v124, 30
    %v126 = vsub.s32 %v122, %v125
    %vm127 = vcmp.lt.s32.totalorder %v126, 0
    %v128 = vsub.s32 0, %v126
    %v129 = vsel %vm127, %v128, %v126
    %v130 = vclz %v129
    %v131 = vsub.s32 %v130, 2
    %vm132 = vcmp.gt.s32.totalorder 0, %v131
    %v133 = vsel %vm132, 0, %v131
    %v134 = vsub.s32 32, %v133
    %v135 = vshll.u32 %v126, %v133
    %v136 = vshrl.u32 %v118, %v134
    %v137 = vor.u32 %v135, %v136
    %v138 = vsub.s32 4294967266, %v133
    %v139 = vadd.s32 %v138, 127
    %v140 = vshll.u32 %v139, 23
    %v141 = vor.u32 4788187, %v140
    %v142 = vand.u32 2147483647, %v141
    %v144 = vcvt.s32.f32 %v137
    %v145 = vmul.f32 %v144, %v142
    %v146 = vxor.u32 %v145, 2147483648
    %v147 = vsel %vm64, %v146, %v145
    %v148 = vsub.s32 4, %v124
    %v149 = vsel %vm64, %v148, %v124
    %v150 = vsel %vm63, %v61, %v147
    %v151 = vsel %vm63, 0, %v149
    %v152 = vcosq.f32.pop %v150
    %v153 = vsinq.f32.pop %v150
    %vm154 = vweird.f32 %v61
    %v155 = vadd.s32 %v151, 3
    %v156 = vand.u32 %v155, 3
    %vm157 = vcmp.lt.s32.totalorder %v156, 2
    %vm158 = vcmp.eq.s32.totalorder %v156, 0
    %v159 = vxor.u32 %v153, 2147483648
    %v160 = vsel %vm158, %v152, %v159
    %vm161 = vcmp.eq.s32.totalorder %v156, 2
    %v162 = vxor.u32 %v152, 2147483648
    %v163 = vsel %vm161, %v162, %v153
    %v164 = vsel %vm157, %v160, %v163
    %v165 = vsel %vm154, nan, %v164
    %v166 = vld [vmem:[#allocation3] sm:$0xff]
    %v167 = vmul.f32 %v165, %v165
    %v168 = vmul.f32 %v167, 2.0
    %v169 = vadd.f32 %v166, %v168
    %170 = vst [vmem:[#allocation3] sm:$0xff] %v169
    // Predicated region
    $region22: #{tpu_custom_call.1} parent=1 // pred_check
      %p171 = pneg %p40
    $region23: #{tpu_custom_call.1} parent=1 // pred_check_branch
      %173 = sbr.rel (%p171) target = $region25
    $region24: #{tpu_custom_call.1} parent=1 // pred_region
      %v174 = vld [vmem:[#allocation2] sm:$0xff]
      %175 = vadd.xlane.f32.xlu0 %v174
      %v176 = vpop.xlane.xlu0 %175
      %v177 = vrot.slane %v176, 4
      %v178 = vadd.f32 %v176, %v177
      %v179 = vrot.slane %v178, 2
      %v180 = vadd.f32 %v178, %v179
      %v181 = vrot.slane %v180, 1
      %v182 = vadd.f32 %v180, %v181
      %s183 = vtos %v182
      %s184 = smul.f32 %s183, 0.125
      %v185 = vld [vmem:[#allocation3] sm:$0xff]
      %186 = vadd.xlane.f32.xlu0 %v185
      %v187 = vpop.xlane.xlu0 %186
      %v188 = vrot.slane %v187, 4
      %v189 = vadd.f32 %v187, %v188
      %v190 = vrot.slane %v189, 2
      %v191 = vadd.f32 %v189, %v190
      %v192 = vrot.slane %v191, 1
      %v193 = vadd.f32 %v191, %v192
      %s194 = vtos %v193
      %s195 = smul.f32 %s194, 0.125
      %s196 = sadd.f32 %s184, %s195
      %s197 = scalar_lea.smem [#allocation9], 0
      %198 = sst [smem:[%s197]] %s196
      %s199 = scalar_lea.smem [#allocation9], 1
      %200 = sst [smem:[%s199]] %s184
      %s201 = scalar_lea.smem [#allocation9], 2
      %202 = sst [smem:[%s201]] %s195
    $region25: #{tpu_custom_call.1} parent=1 // pred_fallthru
      _
    // Predicated region
    $region26: #{tpu_custom_call.1} parent=1 // pred_check
      _
    $region27: #{tpu_custom_call.1} parent=1 // pred_check_branch
      %204 = sbr.rel (0) target = $region29
    $region28: #{tpu_custom_call.1} parent=1 // pred_region
      %s206 = ssub.s32 16, 16
      %207 = vsyncadd [#allocation6], %s206
      %210 = dma.smem_to_hbm [#allocation9], 16, %s2, [#allocation6]
    $region29: #{tpu_custom_call.1} parent=1 // pred_fallthru
      _
    // Predicated region
    $region30: #{tpu_custom_call.1} parent=1 // pred_check
      _
    $region31: #{tpu_custom_call.1} parent=1 // pred_check_branch
      %212 = sbr.rel (0) target = $region33
    $region32: #{tpu_custom_call.1} parent=1 // pred_region
      %213 = dma.done [#allocation6], 16
    $region33: #{tpu_custom_call.1} parent=1 // pred_fallthru
      _
    %214 = sfence
    %215 = vsyncpa [#allocation5], 1
    %216 = vsyncpa [#allocation8], 1
    %217 = vsyncpa [#allocation6], 1

</llo_original>
